<compile_context>
chip_gen: v6e
topology: v6e:2x2x1
jax: 0.10.0
libtpu: 0.0.40
codegen_flags: <defaults>
</compile_context>

<pallas_src>
import functools

import jax
import jax.numpy as jnp
from jax.experimental import pallas as pl
from jax.experimental.pallas import tpu as pltpu


# --------------------------------------------------------------------------- #
# Kernel
# --------------------------------------------------------------------------- #
def _attention_kernel(x_ref, wqkv_ref, wo_ref, o_ref, *, scale, batch_block, seq):
    bb, s = batch_block, seq
    rows, dp = x_ref.shape  # rows == bb * s, dp == padded dim (multiple of 128)

    x2 = x_ref[...]  # (bb*S, Dp) bf16, lane-dense slab

    # ---- fused QKV projection: one (bb*S, Dp) @ (Dp, 3*Dp) bf16 matmul ------
    qkv = jnp.dot(x2, wqkv_ref[...], preferred_element_type=jnp.float32)
    q = qkv[:, :dp] * scale          # pre-scale q (touches S*D, not S*S elems)
    k = qkv[:, dp:2 * dp]
    v = qkv[:, 2 * dp:]

    # bf16 operands only where the contraction dim is large enough to matter:
    #   scores contracts over Dp (>=128)  -> bf16 q, k
    #   ctx    contracts over S           -> bf16 only when S >= 128
    ctx_mm_dtype = jnp.bfloat16 if s >= 128 else jnp.float32

    qb = q.astype(jnp.bfloat16).reshape(bb, s, dp)
    kb = k.astype(jnp.bfloat16).reshape(bb, s, dp)
    vb = v.astype(ctx_mm_dtype).reshape(bb, s, dp)

    # ---- scores = q @ k^T (batched contraction on last dims, no transpose) --
    scores = jnp.einsum("bqd,bkd->bqk", qb, kb,
                        preferred_element_type=jnp.float32)  # (bb, s, s) f32

    # ---- softmax (f32 math, EUP reciprocal) ----------------------------------
    scores = scores - jnp.max(scores, axis=-1, keepdims=True)
    p = jnp.exp(scores)
    denom = jnp.sum(p, axis=-1, keepdims=True)
    attn = (p * pl.reciprocal(denom, approx=True)).astype(ctx_mm_dtype)

    # ---- context & output projection -----------------------------------------
    ctx = jnp.einsum("bqk,bkd->bqd", attn, vb,
                     preferred_element_type=jnp.float32)     # (bb, s, dp) f32
    ctx2 = ctx.astype(jnp.bfloat16).reshape(rows, dp)
    out = jnp.dot(ctx2, wo_ref[...], preferred_element_type=jnp.float32)

    o_ref[...] = out.astype(o_ref.dtype)                     # full-width store


# --------------------------------------------------------------------------- #
# Wrapper helpers
# --------------------------------------------------------------------------- #
def _round_up(x, m):
    return (x + m - 1) // m * m


def _vmem_capacity_bytes():
    try:
        cap = int(pltpu.get_tpu_info().vmem_capacity_bytes)
        if cap > 0:
            return cap
    except Exception:
        pass
    return 128 << 20  # conservative v5e/v6e default


def _pick_batch_block(batch, s, dp, budget_bytes):
    """Largest divisor of `batch` whose working set fits, keeping >=2 grid
    steps when batch >= 2 (so v7x's second TensorCore gets work)."""
    max_bb = batch if batch < 2 else max(1, batch // 2)
    for bb in range(max_bb, 0, -1):
        if batch % bb:
            continue
        rows = bb * s
        io_bytes = 2 * rows * dp * (2 + 4)                 # dbl-buf x(bf16)+out(f32)
        tmp_bytes = (8 * rows * dp + 3 * bb * s * s) * 4   # qkv/ctx/out + scores (f32)
        if io_bytes + tmp_bytes <= budget_bytes or bb == 1:
            return bb
    return 1


def prepare_attention_weights(wq, wk, wv, wo, *, dim):
    """One-time prep (per layer): transpose to (in,out), zero-pad dim to a
    multiple of 128, cast to bf16, fuse q/k/v along the output axis."""
    D = dim
    Dp = _round_up(D, 128)

    def pad_t(w):
        wp = jnp.zeros((Dp, Dp), dtype=jnp.bfloat16)
        return wp.at[:D, :D].set(w.T.astype(jnp.bfloat16))

    wqkv_p = jnp.concatenate([pad_t(wq), pad_t(wk), pad_t(wv)], axis=1)  # (Dp, 3Dp)
    wo_p = pad_t(wo)                                                     # (Dp, Dp)
    return wqkv_p, wo_p


@functools.partial(jax.jit, static_argnames=("dim",))
def attention_forward(x, wqkv_p, wo_p, *, dim):
    """x: (B, S, dim). wqkv_p/wo_p from prepare_attention_weights."""
    B, S, D = x.shape
    assert D == dim
    Dp = wo_p.shape[0]
    assert Dp == _round_up(D, 128) and wqkv_p.shape == (Dp, 3 * Dp)

    vmem_cap = _vmem_capacity_bytes()
    bb = _pick_batch_block(B, S, Dp, budget_bytes=vmem_cap // 4)
    rows_blk = bb * S

    # Lane-dense 2D input slab (B*S, Dp), bf16, zero-padded columns.
    x2 = x.reshape(B * S, D).astype(jnp.bfloat16)
    if Dp != D:
        x2 = jnp.pad(x2, ((0, 0), (0, Dp - D)))

    kernel = functools.partial(_attention_kernel,
                               scale=1.0 / (dim ** 0.5),
                               batch_block=bb, seq=S)

    # VMEM budget: double-buffered x/out tiles + resident fused weights + f32
    # intermediates, 2x headroom, capped at 3/4 of physical VMEM (so v7x's
    # 64 MiB is never fully requested).
    weights_bytes = (Dp * 3 * Dp + Dp * Dp) * 2 * 2
    step_bytes = 2 * rows_blk * Dp * (2 + 4) + (8 * rows_blk * Dp + 3 * bb * S * S) * 4
    vmem_bytes = int(min(max(2 * (weights_bytes + step_bytes), 16 << 20),
                         (vmem_cap * 3) // 4))

    out2 = pl.pallas_call(
        kernel,
        out_shape=jax.ShapeDtypeStruct((B * S, Dp), x.dtype),
        grid_spec=pltpu.PrefetchScalarGridSpec(
            num_scalar_prefetch=0,
            grid=(B // bb,),
            in_specs=[
                pl.BlockSpec((rows_blk, Dp), lambda i: (i, 0)),   # x slab
                pl.BlockSpec((Dp, 3 * Dp), lambda i: (0, 0)),     # fused Wqkv^T
                pl.BlockSpec((Dp, Dp), lambda i: (0, 0)),         # Wo^T
            ],
            out_specs=pl.BlockSpec((rows_blk, Dp), lambda i: (i, 0)),
        ),
        compiler_params=pltpu.CompilerParams(
            dimension_semantics=("parallel",),
            vmem_limit_bytes=vmem_bytes,
        ),
    )(x2, wqkv_p, wo_p)

    # Drop the lane padding (exact: padded columns are identically zero).
    return out2.reshape(B, S, Dp)[:, :, :D]


# --------------------------------------------------------------------------- #
# Reference & test
# --------------------------------------------------------------------------- #
def _reference(x, wq, wk, wv, wo, *, dim):
    q = x @ wq.T
    k = x @ wk.T
    v = x @ wv.T
    scores = jnp.einsum("bqd,bkd->bqk", q, k) / (dim ** 0.5)
    attn = jax.nn.softmax(scores, axis=-1)
    ctx = jnp.einsum("bqk,bkd->bqd", attn, v)
    return ctx @ wo.T


if __name__ == "__main__":
    # Small shapes consistent with the module: dim=32, n_heads=4 (head_dim=8),
    # batch=2, seq=8.  The forward never splits heads, so attention is over
    # the full dim.
    B, S, DIM, N_HEADS = 2, 8, 32, 4

    key = jax.random.PRNGKey(0)
    kx, kq, kk, kv, ko = jax.random.split(key, 5)

    x = jax.random.normal(kx, (B, S, DIM), dtype=jnp.float32)
    # nn.Linear(dim, n_heads*head_dim) weight shape: (out, in) = (DIM, DIM)
    w_scale = 1.0 / (DIM ** 0.5)
    wq = jax.random.normal(kq, (DIM, DIM), dtype=jnp.float32) * w_scale
    wk = jax.random.normal(kk, (DIM, DIM), dtype=jnp.float32) * w_scale
    wv = jax.random.normal(kv, (DIM, DIM), dtype=jnp.float32) * w_scale
    wo = jax.random.normal(ko, (DIM, DIM), dtype=jnp.float32) * w_scale

    # One-time weight prep (per-layer constants), reused across forwards.
    wqkv_p, wo_p = prepare_attention_weights(wq, wk, wv, wo, dim=DIM)
    wqkv_p, wo_p = jax.block_until_ready((wqkv_p, wo_p))

    out = attention_forward(x, wqkv_p, wo_p, dim=DIM)
    out = jax.block_until_ready(out)

    ref = _reference(x, wq, wk, wv, wo, dim=DIM)
    assert out.shape == (B, S, DIM)
    # bf16 MXU operands (f32 accumulation) + approx reciprocal -> loosened tol.
    assert jnp.allclose(out, ref, atol=5e-2, rtol=5e-2), "mismatch vs reference"

    print("KERNEL_OK")
</pallas_src>

<mosaic_0001>
module attributes {stable_mosaic.version = 11 : i64} {
  func.func @_attention_kernel(%arg0: i32, %arg1: memref<8x128xbf16, #tpu.memory_space<vmem>>, %arg2: memref<128x384xbf16, #tpu.memory_space<vmem>>, %arg3: memref<128x128xbf16, #tpu.memory_space<vmem>>, %arg4: memref<8x128xf32, #tpu.memory_space<vmem>>) attributes {dimension_semantics = [#tpu.dimension_semantics<parallel>], iteration_bounds = array<i64: 2>, scalar_prefetch = 0 : i64, scratch_operands = 0 : i64, tpu.core_type = #tpu.core_type<tc>, window_params = [{transform_indices = @transform_0, window_bounds = array<i64: 8, 128>}, {pipeline_mode = #tpu.pipeline_mode<synchronous>, transform_indices = @transform_1, window_bounds = array<i64: 128, 384>}, {pipeline_mode = #tpu.pipeline_mode<synchronous>, transform_indices = @transform_2, window_bounds = array<i64: 128, 128>}, {transform_indices = @transform_3, window_bounds = array<i64: 8, 128>}]} {
    %c0 = arith.constant 0 : index
    %c0_0 = arith.constant 0 : index
    %0 = vector.load %arg1[%c0, %c0_0] : memref<8x128xbf16, #tpu.memory_space<vmem>>, vector<8x128xbf16>
    %c0_1 = arith.constant 0 : index
    %c0_2 = arith.constant 0 : index
    %1 = vector.load %arg2[%c0_1, %c0_2] : memref<128x384xbf16, #tpu.memory_space<vmem>>, vector<128x384xbf16>
    %cst = arith.constant dense<0.000000e+00> : vector<8x384xf32>
    %2 = tpu.matmul %0, %1, %cst {dimension_numbers = #tpu.dot_dimension_numbers<[1], [0], [0], [1], [0, 0, 1, 1], [], []>} : vector<8x128xbf16>, vector<128x384xbf16>, vector<8x384xf32> -> vector<8x384xf32>
    %3 = vector.extract_strided_slice %2 {offsets = [0, 0], sizes = [8, 128], strides = [1, 1]} : vector<8x384xf32> to vector<8x128xf32>
    %cst_3 = arith.constant 0.176776692 : f32
    %4 = vector.broadcast %cst_3 : f32 to vector<8x128xf32>
    %5 = arith.mulf %3, %4 : vector<8x128xf32>
    %6 = vector.extract_strided_slice %2 {offsets = [0, 128], sizes = [8, 128], strides = [1, 1]} : vector<8x384xf32> to vector<8x128xf32>
    %7 = vector.extract_strided_slice %2 {offsets = [0, 256], sizes = [8, 128], strides = [1, 1]} : vector<8x384xf32> to vector<8x128xf32>
    %8 = arith.truncf %5 : vector<8x128xf32> to vector<8x128xbf16>
    %9 = vector.shape_cast %8 : vector<8x128xbf16> to vector<1x8x128xbf16>
    %10 = arith.truncf %6 : vector<8x128xf32> to vector<8x128xbf16>
    %11 = vector.shape_cast %10 : vector<8x128xbf16> to vector<1x8x128xbf16>
    %12 = vector.shape_cast %7 : vector<8x128xf32> to vector<1x8x128xf32>
    "tpu.trace_start"() <{level = 10 : i32, message = "bqd,bkd->bqk"}> : () -> ()
    %cst_4 = arith.constant dense<0.000000e+00> : vector<1x8x8xf32>
    %13 = tpu.matmul %9, %11, %cst_4 {dimension_numbers = #tpu.dot_dimension_numbers<[2], [2], [1], [1], [0, 0, 0, 1, 1, 1], [0], [0]>} : vector<1x8x128xbf16>, vector<1x8x128xbf16>, vector<1x8x8xf32> -> vector<1x8x8xf32>
    "tpu.trace_stop"() : () -> ()
    %cst_5 = arith.constant dense<0xFF800000> : vector<1x8xf32>
    %14 = vector.multi_reduction <maximumf>, %13, %cst_5 [2] : vector<1x8x8xf32> to vector<1x8xf32>
    %15 = vector.shape_cast %14 : vector<1x8xf32> to vector<1x8x1xf32>
    %16 = vector.broadcast %15 : vector<1x8x1xf32> to vector<1x8x8xf32>
    %17 = arith.subf %13, %16 : vector<1x8x8xf32>
    %18 = math.exp %17 : vector<1x8x8xf32>
    %cst_6 = arith.constant dense<0.000000e+00> : vector<1x8xf32>
    %19 = vector.multi_reduction <add>, %18, %cst_6 [2] : vector<1x8x8xf32> to vector<1x8xf32>
    %20 = vector.shape_cast %19 : vector<1x8xf32> to vector<1x8x1xf32>
    %21 = tpu.reciprocal %20 {approx = true} : vector<1x8x1xf32> -> vector<1x8x1xf32>
    %22 = vector.broadcast %21 : vector<1x8x1xf32> to vector<1x8x8xf32>
    %23 = arith.mulf %18, %22 : vector<1x8x8xf32>
    "tpu.trace_start"() <{level = 10 : i32, message = "bqk,bkd->bqd"}> : () -> ()
    %cst_7 = arith.constant dense<0.000000e+00> : vector<1x8x128xf32>
    %24 = tpu.matmul %23, %12, %cst_7 {dimension_numbers = #tpu.dot_dimension_numbers<[2], [1], [1], [2], [0, 0, 0, 1, 1, 2], [0], [0]>} : vector<1x8x8xf32>, vector<1x8x128xf32>, vector<1x8x128xf32> -> vector<1x8x128xf32>
    "tpu.trace_stop"() : () -> ()
    %25 = arith.truncf %24 : vector<1x8x128xf32> to vector<1x8x128xbf16>
    %26 = vector.shape_cast %25 : vector<1x8x128xbf16> to vector<8x128xbf16>
    %c0_8 = arith.constant 0 : index
    %c0_9 = arith.constant 0 : index
    %27 = vector.load %arg3[%c0_8, %c0_9] : memref<128x128xbf16, #tpu.memory_space<vmem>>, vector<128x128xbf16>
    %cst_10 = arith.constant dense<0.000000e+00> : vector<8x128xf32>
    %28 = tpu.matmul %26, %27, %cst_10 {dimension_numbers = #tpu.dot_dimension_numbers<[1], [0], [0], [1], [0, 0, 1, 1], [], []>} : vector<8x128xbf16>, vector<128x128xbf16>, vector<8x128xf32> -> vector<8x128xf32>
    %c0_11 = arith.constant 0 : index
    %c0_12 = arith.constant 0 : index
    %29 = vector.load %arg4[%c0_11, %c0_12] : memref<8x128xf32, #tpu.memory_space<vmem>>, vector<8x128xf32>
    tpu.vector_store %arg4[%c0_11, %c0_12], %28 {strides = array<i32>} : memref<8x128xf32, #tpu.memory_space<vmem>>, vector<8x128xf32>,
    return
  }
  func.func @transform_0(%arg0: i32) -> (i32, i32) {
    %c0_i32 = arith.constant 0 : i32
    %c0_i32_0 = arith.constant 0 : i32
    return %arg0, %c0_i32 : i32, i32
  }
  func.func @transform_1(%arg0: i32) -> (i32, i32) {
    %c0_i32 = arith.constant 0 : i32
    %c0_i32_0 = arith.constant 0 : i32
    %c0_i32_1 = arith.constant 0 : i32
    return %c0_i32, %c0_i32_0 : i32, i32
  }
  func.func @transform_2(%arg0: i32) -> (i32, i32) {
    %c0_i32 = arith.constant 0 : i32
    %c0_i32_0 = arith.constant 0 : i32
    %c0_i32_1 = arith.constant 0 : i32
    return %c0_i32, %c0_i32_0 : i32, i32
  }
  func.func @transform_3(%arg0: i32) -> (i32, i32) {
    %c0_i32 = arith.constant 0 : i32
    %c0_i32_0 = arith.constant 0 : i32
    return %arg0, %c0_i32 : i32, i32
  }
}

</mosaic_0001>

<llo_original>
// kernel: attention_forward.1
$region0: #{attention_forward.1}
  #allocation0 [shape = 'u32[]', space=smem, size = 0x4, offset = 0x4, fixed_abs, tag = 'smem constant byte address 0x4 - core index']
  #allocation1 [shape = 'u32[144,128]{1,0:T(1,128)}', space=vmem, size = 0x12000, scoped, tag = 'internal scratch']
  %s0 = inlined_call_operand.vmem [shape: bf16[16,128], index: 0, kind: input, shape index: {}]
  %s1 = inlined_call_operand.hbm [shape: bf16[128,384], index: 1, kind: input, shape index: {}]
  %s2 = inlined_call_operand.hbm [shape: bf16[128,128], index: 2, kind: input, shape index: {}]
  %s3 = inlined_call_operand.hbm [shape: f32[16,128], index: 3, kind: output, shape index: {}]
  %s4 = sld [smem:[#allocation0]]
  $region53: #{attention_forward.1} parent=0
    _
  %s6 = ssub.s32 1, %s4
  %s7 = scalar_select 0, %s6, %s4
  $region1: #{attention_forward.1} parent=0
    #allocation2 [shape = 'u8[98304]{0}', space=vmem, size = 0x18000, scoped, tag = 'input window, operand 1, single buffered']
    #allocation3 [shape = 's32[2]{0}', space=sflag, size = 0x8, scoped, tag = 'scoped memory for attention_forward.1']
    #allocation4 [shape = 's32[2]{0}', space=sflag, size = 0x8, scoped, tag = 'scoped memory for attention_forward.1']
    #allocation5 [shape = 'u8[32768]{0}', space=vmem, size = 0x8000, scoped, tag = 'input window, operand 2, single buffered']
    #allocation6 [shape = 's32[1]{0}', space=sflag, size = 0x4, scoped, tag = 'scoped memory for attention_forward.1']
    #allocation7 [shape = 'u8[8192]{0}', space=vmem, size = 0x2000, scoped, tag = 'output window, operand 0']
    %8 = vsyncpa [#allocation3], 0
    %9 = vsyncpa [#allocation6], 0
    %10 = vsyncpa [#allocation4], 0
    %s11 = scalar_lea.sflag [#allocation4], 1
    %12 = vsyncpa %s11, 0
    loop: start=0, step=1, limit=4
    $region2: #{attention_forward.1} parent=1 // loop_pre_header
      _
    $region3: #{attention_forward.1} parent=1 // loop_header
      %s14 = sphi 0, %s18
      %p15 = scmp.ge.s32.totalorder %s14, 4
      %s24 = sphi 0, %s26
      %s27 = sphi 0, %s24
      %s28 = sphi 0, %s27
      %s44 = sphi 0, %s28
      %s48 = sphi 0, %s48
      %s50 = sphi 0, %s48
      %s51 = sphi 0, %s50
      %s65 = sphi 0, %s51
      %s69 = sphi 0, %s69
      %s71 = sphi 0, %s69
      %s72 = sphi 0, %s71
      %s86 = sphi 0, %s72
      %s92 = sphi 0, %s94
      %s95 = sphi 0, %s92
      %s96 = sphi 0, %s95
      %s112 = sphi 0, %s96
    $region4: #{attention_forward.1} parent=1 // loop_header_branch
      %17 = sbr.rel (%p15) target = $region8
    $region5: #{attention_forward.1} parent=1 // loop_body
      %s19 = ssub.s32 %s14, 1
      %s20 = ssub.s32 %s14, 2
      %s21 = sadd.s32 %s14, 1
      %s22 = ssub.s32 %s14, %s21
      %p23 = scmp.eq.s32.totalorder %s22, 0
      %s25 = sadd.s32 %s24, 1
      %s26 = scalar_select %p23, %s24, %s25
      %p29 = pneg %p23
      %p30 = scmp.eq.s32.totalorder %s14, 1
      %p31 = por %p29, %p30
      %p32 = scmp.ne.s32.totalorder %s24, %s27
      %p33 = scmp.eq.s32.totalorder %s14, 0
      %p34 = por %p32, %p33
      %p35 = scmp.ne.s32.totalorder %s24, %s27
      %p36 = scmp.eq.s32.totalorder %s19, 1
      %p37 = por %p35, %p36
      %p38 = scmp.ne.s32.totalorder %s27, %s28
      %p39 = scmp.eq.s32.totalorder %s19, 0
      %p40 = por %p38, %p39
      %p41 = scmp.ne.s32.totalorder %s27, %s28
      %p42 = scmp.eq.s32.totalorder %s20, 1
      %p43 = por %p41, %p42
      %p45 = scmp.ne.s32.totalorder %s28, %s44
      %p46 = scmp.eq.s32.totalorder %s20, 0
      %p47 = por %p45, %p46
      %s49 = sadd.s32 %s48, 1
      %p52 = scmp.eq.s32.totalorder %s14, 1
      %p53 = scmp.ne.s32.totalorder %s48, %s50
      %p54 = scmp.eq.s32.totalorder %s14, 0
      %p55 = por %p53, %p54
      %p56 = scmp.ne.s32.totalorder %s48, %s50
      %p57 = scmp.eq.s32.totalorder %s19, 1
      %p58 = por %p56, %p57
      %p59 = scmp.ne.s32.totalorder %s50, %s51
      %p60 = scmp.eq.s32.totalorder %s19, 0
      %p61 = por %p59, %p60
      %p62 = scmp.ne.s32.totalorder %s50, %s51
      %p63 = scmp.eq.s32.totalorder %s20, 1
      %p64 = por %p62, %p63
      %p66 = scmp.ne.s32.totalorder %s51, %s65
      %p67 = scmp.eq.s32.totalorder %s20, 0
      %p68 = por %p66, %p67
      %s70 = sadd.s32 %s69, 1
      %p73 = scmp.eq.s32.totalorder %s14, 1
      %p74 = scmp.ne.s32.totalorder %s69, %s71
      %p75 = scmp.eq.s32.totalorder %s14, 0
      %p76 = por %p74, %p75
      %p77 = scmp.ne.s32.totalorder %s69, %s71
      %p78 = scmp.eq.s32.totalorder %s19, 1
      %p79 = por %p77, %p78
      %p80 = scmp.ne.s32.totalorder %s71, %s72
      %p81 = scmp.eq.s32.totalorder %s19, 0
      %p82 = por %p80, %p81
      %p83 = scmp.ne.s32.totalorder %s71, %s72
      %p84 = scmp.eq.s32.totalorder %s20, 1
      %p85 = por %p83, %p84
      %p87 = scmp.ne.s32.totalorder %s72, %s86
      %p88 = scmp.eq.s32.totalorder %s20, 0
      %p89 = por %p87, %p88
      %s90 = ssub.s32 %s14, %s21
      %p91 = scmp.eq.s32.totalorder %s90, 0
      %s93 = sadd.s32 %s92, 1
      %s94 = scalar_select %p91, %s92, %s93
      %p97 = pneg %p91
      %p98 = scmp.eq.s32.totalorder %s14, 1
      %p99 = por %p97, %p98
      %p100 = scmp.ne.s32.totalorder %s92, %s95
      %p101 = scmp.eq.s32.totalorder %s14, 0
      %p102 = por %p100, %p101
      %p103 = scmp.ne.s32.totalorder %s92, %s95
      %p104 = scmp.eq.s32.totalorder %s19, 1
      %p105 = por %p103, %p104
      %p106 = scmp.ne.s32.totalorder %s95, %s96
      %p107 = scmp.eq.s32.totalorder %s19, 0
      %p108 = por %p106, %p107
      %p109 = scmp.ne.s32.totalorder %s95, %s96
      %p110 = scmp.eq.s32.totalorder %s20, 1
      %p111 = por %p109, %p110
      %p113 = scmp.ne.s32.totalorder %s96, %s112
      %p114 = scmp.eq.s32.totalorder %s20, 0
      %p115 = por %p113, %p114
      %p116 = scmp.le.s32.totalorder 1, %s14
      %p117 = scmp.lt.s32.totalorder %s14, 3
      %p118 = pnand %p116, %p117
      %p119 = pneg %p118
      // Predicated region
      $region9: #{attention_forward.1} parent=5 // pred_check
        _
      $region10: #{attention_forward.1} parent=5 // pred_check_branch
        %121 = sbr.rel (%p118) target = $region12
      $region11: #{attention_forward.1} parent=5 // pred_region
        %s122 = ssub.s32 %s14, 1
        // Predicated region
        $region13: #{attention_forward.1} parent=11 // pred_check
          %p123 = pneg %p61
        $region14: #{attention_forward.1} parent=11 // pred_check_branch
          %125 = sbr.rel (%p123) target = $region16
        $region15: #{attention_forward.1} parent=11 // pred_region
          %s127 = ssub.s32 3072, 3072
          %128 = vsyncadd [#allocation3], %s127
          %s129 = sshll.u32 [#allocation2], 4
          %s130 = int_to_ptr.vmem [resolvable:$true] %s129
          %135 = dma.hbm_to_vmem [thread:$0]  %s1, 3072, %s130, [#allocation3], 192, 192, 12
        $region16: #{attention_forward.1} parent=11 // pred_fallthru
          _
        // Predicated region
        $region17: #{attention_forward.1} parent=11 // pred_check
          %p136 = pneg %p82
        $region18: #{attention_forward.1} parent=11 // pred_check_branch
          %138 = sbr.rel (%p136) target = $region20
        $region19: #{attention_forward.1} parent=11 // pred_region
          %s140 = ssub.s32 1024, 1024
          %141 = vsyncadd [#allocation6], %s140
          %s142 = sshll.u32 [#allocation5], 4
          %s143 = int_to_ptr.vmem [resolvable:$true] %s142
          %148 = dma.hbm_to_vmem [thread:$0]  %s2, 1024, %s143, [#allocation6], 64, 64, 4
        $region20: #{attention_forward.1} parent=11 // pred_fallthru
          _
      $region12: #{attention_forward.1} parent=5 // pred_fallthru
        _
      %p149 = scmp.lt.s32.totalorder %s14, 2
      // Predicated region
      $region21: #{attention_forward.1} parent=5 // pred_check
        %p150 = pneg %p149
      $region22: #{attention_forward.1} parent=5 // pred_check_branch
        %152 = sbr.rel (%p150) target = $region24
      $region23: #{attention_forward.1} parent=5 // pred_region
        // Predicated region
        $region25: #{attention_forward.1} parent=23 // pred_check
          %p153 = pneg %p34
        $region26: #{attention_forward.1} parent=23 // pred_check_branch
          %155 = sbr.rel (%p153) target = $region28
        $region27: #{attention_forward.1} parent=23 // pred_region
          %p156 = scmp.lt.s32.totalorder %s14, 1
          %s157 = scalar_select %p156, %s14, 1
          %s158 = smul.addr %s157, 4
          %s159 = scalar_lea.vmem %s0, %s158
        $region28: #{attention_forward.1} parent=23 // pred_fallthru
          _
      $region24: #{attention_forward.1} parent=5 // pred_fallthru
        _
      %p160 = scmp.le.s32.totalorder 1, %s14
      %p161 = scmp.lt.s32.totalorder %s14, 3
      %p162 = pnand %p160, %p161
      %p163 = pneg %p162
      // Predicated region
      $region29: #{attention_forward.1} parent=5 // pred_check
        _
      $region30: #{attention_forward.1} parent=5 // pred_check_branch
        %165 = sbr.rel (%p162) target = $region32
      $region31: #{attention_forward.1} parent=5 // pred_region
        %s166 = ssub.s32 %s14, 1
        // Predicated region
        $region33: #{attention_forward.1} parent=31 // pred_check
          %p167 = pneg %p61
        $region34: #{attention_forward.1} parent=31 // pred_check_branch
          %169 = sbr.rel (%p167) target = $region36
        $region35: #{attention_forward.1} parent=31 // pred_region
          %170 = dma.done [#allocation3], 3072
        $region36: #{attention_forward.1} parent=31 // pred_fallthru
          _
        // Predicated region
        $region37: #{attention_forward.1} parent=31 // pred_check
          %p171 = pneg %p82
        $region38: #{attention_forward.1} parent=31 // pred_check_branch
          %173 = sbr.rel (%p171) target = $region40
        $region39: #{attention_forward.1} parent=31 // pred_region
          %174 = dma.done [#allocation6], 1024
        $region40: #{attention_forward.1} parent=31 // pred_fallthru
          _
        %p175 = scmp.lt.s32.totalorder %s19, 1
        %s176 = scalar_select %p175, %s19, 1
        %s177 = smul.addr %s176, 4
        %s178 = scalar_lea.vmem %s0, %s177
        %p179 = pneg %p40
        %p180 = pneg %p37
        %p181 = pneg %p61
        %p182 = pneg %p58
        %p183 = pneg %p82
        %p184 = pneg %p79
        %p185 = pneg %p108
        %p186 = pneg %p105
        %s187 = sand.u32 %s95, 1
        %s188 = scalar_lea.sflag [#allocation4], %s187
        %s189 = sand.u32 %s95, 1
        %s190 = smul.addr %s189, 8
        %s191 = scalar_lea.vmem [#allocation7], %s190
        %p192 = scmp.lt.s32.totalorder %s19, 1
        %s193 = scalar_select %p192, %s19, 1
        %s194 = smul.addr %s193, 4
        %s195 = scalar_lea.vmem %s0, %s194
        %v197 = vld [vmem:[%s195] sm:$0xf]
        %v198 = vld [vmem:[#allocation2] sm:$0xff]
        %v199 = vld [vmem:[#allocation2 + $0x8] sm:$0xf]
        %v200 = vld [vmem:[#allocation2 + $0xc] sm:$0xff]
        %v201 = vld [vmem:[#allocation2 + $0x14] sm:$0xf]
        %v202 = vld [vmem:[#allocation2 + $0x18] sm:$0xff]
        %v203 = vld [vmem:[#allocation2 + $0x20] sm:$0xf]
        %v204 = vld [vmem:[#allocation2 + $0x24] sm:$0xff]
        %v205 = vld [vmem:[#allocation2 + $0x2c] sm:$0xf]
        %v206 = vld [vmem:[#allocation2 + $0x30] sm:$0xff]
        %v207 = vld [vmem:[#allocation2 + $0x38] sm:$0xf]
        %v208 = vld [vmem:[#allocation2 + $0x3c] sm:$0xff]
        %v209 = vld [vmem:[#allocation2 + $0x44] sm:$0xf]
        %v210 = vld [vmem:[#allocation2 + $0x48] sm:$0xff]
        %v211 = vld [vmem:[#allocation2 + $0x50] sm:$0xf]
        %v212 = vld [vmem:[#allocation2 + $0x54] sm:$0xff]
        %v213 = vld [vmem:[#allocation2 + $0x5c] sm:$0xf]
        %v214 = vld [vmem:[#allocation2 + $0x60] sm:$0xff]
        %v215 = vld [vmem:[#allocation2 + $0x68] sm:$0xf]
        %v216 = vld [vmem:[#allocation2 + $0x6c] sm:$0xff]
        %v217 = vld [vmem:[#allocation2 + $0x74] sm:$0xf]
        %v218 = vld [vmem:[#allocation2 + $0x78] sm:$0xff]
        %v219 = vld [vmem:[#allocation2 + $0x80] sm:$0xf]
        %v220 = vld [vmem:[#allocation2 + $0x84] sm:$0xff]
        %v221 = vld [vmem:[#allocation2 + $0x8c] sm:$0xf]
        %v222 = vld [vmem:[#allocation2 + $0x90] sm:$0xff]
        %v223 = vld [vmem:[#allocation2 + $0x98] sm:$0xf]
        %v224 = vld [vmem:[#allocation2 + $0x9c] sm:$0xff]
        %v225 = vld [vmem:[#allocation2 + $0xa4] sm:$0xf]
        %v226 = vld [vmem:[#allocation2 + $0xa8] sm:$0xff]
        %v227 = vld [vmem:[#allocation2 + $0xb0] sm:$0xf]
        %v228 = vld [vmem:[#allocation2 + $0xb4] sm:$0xff]
        %v229 = vld [vmem:[#allocation2 + $0xbc] sm:$0xf]
        %v262 = vunpack.c.l.b16 %v198
        %v263 = vunpack.c.h.b16 %v198
        %v264 = vunpack.c.l.b16 %v199
        %v265 = vunpack.c.l.b16 %v200
        %v266 = vunpack.c.h.b16 %v200
        %v267 = vunpack.c.l.b16 %v201
        %v268 = vunpack.c.l.b16 %v202
        %v269 = vunpack.c.h.b16 %v202
        %v270 = vunpack.c.l.b16 %v203
        %v271 = vunpack.c.l.b16 %v204
        %v272 = vunpack.c.h.b16 %v204
        %v273 = vunpack.c.l.b16 %v205
        %v274 = vunpack.c.l.b16 %v206
        %v275 = vunpack.c.h.b16 %v206
        %v276 = vunpack.c.l.b16 %v207
        %v277 = vunpack.c.l.b16 %v208
        %v278 = vunpack.c.h.b16 %v208
        %v279 = vunpack.c.l.b16 %v209
        %v280 = vunpack.c.l.b16 %v210
        %v281 = vunpack.c.h.b16 %v210
        %v282 = vunpack.c.l.b16 %v211
        %v283 = vunpack.c.l.b16 %v212
        %v284 = vunpack.c.h.b16 %v212
        %v285 = vunpack.c.l.b16 %v213
        %v286 = vunpack.c.l.b16 %v214
        %v287 = vunpack.c.h.b16 %v214
        %v288 = vunpack.c.l.b16 %v215
        %v289 = vunpack.c.l.b16 %v216
        %v290 = vunpack.c.h.b16 %v216
        %v291 = vunpack.c.l.b16 %v217
        %v292 = vunpack.c.l.b16 %v218
        %v293 = vunpack.c.h.b16 %v218
        %v294 = vunpack.c.l.b16 %v219
        %v295 = vunpack.c.l.b16 %v220
        %v296 = vunpack.c.h.b16 %v220
        %v297 = vunpack.c.l.b16 %v221
        %v298 = vunpack.c.l.b16 %v222
        %v299 = vunpack.c.h.b16 %v222
        %v300 = vunpack.c.l.b16 %v223
        %v301 = vunpack.c.l.b16 %v224
        %v302 = vunpack.c.h.b16 %v224
        %v303 = vunpack.c.l.b16 %v225
        %v304 = vunpack.c.l.b16 %v226
        %v305 = vunpack.c.h.b16 %v226
        %v306 = vunpack.c.l.b16 %v227
        %v307 = vunpack.c.l.b16 %v228
        %v308 = vunpack.c.h.b16 %v228
        %v309 = vunpack.c.l.b16 %v229
        %v310 = vpack.c.b16 %v265, %v262
        %v311 = vpack.c.b16 %v266, %v263
        %v312 = vpack.c.b16 %v267, %v264
        %v313 = vpack.c.b16 %v271, %v268
        %v314 = vpack.c.b16 %v272, %v269
        %v315 = vpack.c.b16 %v273, %v270
        %v316 = vpack.c.b16 %v277, %v274
        %v317 = vpack.c.b16 %v278, %v275
        %v318 = vpack.c.b16 %v279, %v276
        %v319 = vpack.c.b16 %v283, %v280
        %v320 = vpack.c.b16 %v284, %v281
        %v321 = vpack.c.b16 %v285, %v282
        %v322 = vpack.c.b16 %v289, %v286
        %v323 = vpack.c.b16 %v290, %v287
        %v324 = vpack.c.b16 %v291, %v288
        %v325 = vpack.c.b16 %v295, %v292
        %v326 = vpack.c.b16 %v296, %v293
        %v327 = vpack.c.b16 %v297, %v294
        %v328 = vpack.c.b16 %v301, %v298
        %v329 = vpack.c.b16 %v302, %v299
        %v330 = vpack.c.b16 %v303, %v300
        %v331 = vpack.c.b16 %v307, %v304
        %v332 = vpack.c.b16 %v308, %v305
        %v333 = vpack.c.b16 %v309, %v306
        %358 = vmatprep.subr.bf16.mxu0 %v332
        %359 = vmatpush1.bf16.msra.mxu0 %v331
        %360 = vmatprep.subr.bf16.mxu0 %v329
        %361 = vmatpush1.bf16.msra.mxu0 %v328
        %362 = vmatprep.subr.bf16.mxu0 %v326
        %363 = vmatpush1.bf16.msra.mxu0 %v325
        %364 = vmatprep.subr.bf16.mxu0 %v323
        %365 = vmatpush1.bf16.msra.mxu0 %v322
        %366 = vmatprep.subr.bf16.mxu0 %v320
        %367 = vmatpush1.bf16.msra.mxu0 %v319
        %368 = vmatprep.subr.bf16.mxu0 %v317
        %369 = vmatpush1.bf16.msra.mxu0 %v316
        %370 = vmatprep.subr.bf16.mxu0 %v314
        %371 = vmatpush1.bf16.msra.mxu0 %v313
        %372 = vmatprep.subr.bf16.mxu0 %v311
        %373 = vmatpush1.bf16.msra.mxu0 %v310
        %374 = vmatprep.subr.bf16.mxu0 0
        %375 = vmatpush2.bf16.msra.mxu0 0
        %376 = vmatprep.subr.bf16.mxu0 0
        %377 = vmatpush2.bf16.msra.mxu0 0
        %378 = vmatprep.subr.bf16.mxu0 0
        %379 = vmatpush2.bf16.msra.mxu0 0
        %380 = vmatprep.subr.bf16.mxu0 0
        %381 = vmatpush2.bf16.msra.mxu0 0
        %382 = vmatprep.subr.bf16.mxu0 0
        %383 = vmatpush2.bf16.msra.mxu0 0
        %384 = vmatprep.subr.bf16.mxu0 0
        %385 = vmatpush2.bf16.msra.mxu0 0
        %386 = vmatprep.subr.bf16.mxu0 0
        %387 = vmatpush2.bf16.msra.mxu0 0
        %388 = vmatprep.subr.bf16.mxu0 0
        %389 = vmatpush2.bf16.msra.mxu0 0
        %390 = vmatprep.mubr.bf16.mxu0 0
        %391 = vmatmul.mubr.bf16.gmra.mxu0 %v197
        %v392 = vpop.f32.mrf.mxu0
        %v393 = vadd.f32 0.0, %v392
        %v394 = vpop.f32.mrf.mxu0
        %v395 = vadd.f32 0.0, %v394
        %v396 = vpop.f32.mrf.mxu0
        %v397 = vpop.f32.mrf.mxu0
        %398 = vdwg.mxu0
        %399 = vmatprep.subr.bf16.mxu0 0
        %400 = vmatpush1.bf16.msra.mxu0 %v333
        %401 = vmatprep.subr.bf16.mxu0 0
        %402 = vmatpush1.bf16.msra.mxu0 %v330
        %403 = vmatprep.subr.bf16.mxu0 0
        %404 = vmatpush1.bf16.msra.mxu0 %v327
        %405 = vmatprep.subr.bf16.mxu0 0
        %406 = vmatpush1.bf16.msra.mxu0 %v324
        %407 = vmatprep.subr.bf16.mxu0 0
        %408 = vmatpush1.bf16.msra.mxu0 %v321
        %409 = vmatprep.subr.bf16.mxu0 0
        %410 = vmatpush1.bf16.msra.mxu0 %v318
        %411 = vmatprep.subr.bf16.mxu0 0
        %412 = vmatpush1.bf16.msra.mxu0 %v315
        %413 = vmatprep.subr.bf16.mxu0 0
        %414 = vmatpush1.bf16.msra.mxu0 %v312
        %415 = vmatprep.subr.bf16.mxu0 0
        %416 = vmatpush2.bf16.msra.mxu0 0
        %417 = vmatprep.subr.bf16.mxu0 0
        %418 = vmatpush2.bf16.msra.mxu0 0
        %419 = vmatprep.subr.bf16.mxu0 0
        %420 = vmatpush2.bf16.msra.mxu0 0
        %421 = vmatprep.subr.bf16.mxu0 0
        %422 = vmatpush2.bf16.msra.mxu0 0
        %423 = vmatprep.subr.bf16.mxu0 0
        %424 = vmatpush2.bf16.msra.mxu0 0
        %425 = vmatprep.subr.bf16.mxu0 0
        %426 = vmatpush2.bf16.msra.mxu0 0
        %427 = vmatprep.subr.bf16.mxu0 0
        %428 = vmatpush2.bf16.msra.mxu0 0
        %429 = vmatprep.subr.bf16.mxu0 0
        %430 = vmatpush2.bf16.msra.mxu0 0
        %431 = vmatprep.mubr.bf16.mxu0 0
        %432 = vmatmul.mubr.bf16.gmra.mxu0 %v197
        %v433 = vpop.f32.mrf.mxu0
        %v434 = vadd.f32 0.0, %v433
        %v435 = vpop.f32.mrf.mxu0
        %v436 = vpop.f32.mrf.mxu0
        %v437 = vpop.f32.mrf.mxu0
        %438 = vdwg.mxu0
        %v439 = vmul.f32 %v393, 0.17677669
        %v440 = vpack.c.bf16 %v439, %v439
        %v441 = vpack.c.bf16 %v395, %v395
        %442 = vmatprep.subr.bf16.mxu0 0
        %443 = vmatpush1.bf16.xpose.msra.mxu0 0
        %444 = vmatprep.subr.bf16.mxu0 0
        %445 = vmatpush1.bf16.xpose.msra.mxu0 0
        %446 = vmatprep.subr.bf16.mxu0 0
        %447 = vmatpush1.bf16.xpose.msra.mxu0 0
        %448 = vmatprep.subr.bf16.mxu0 0
        %449 = vmatpush1.bf16.xpose.msra.mxu0 0
        %450 = vmatprep.subr.bf16.mxu0 0
        %451 = vmatpush1.bf16.xpose.msra.mxu0 0
        %452 = vmatprep.subr.bf16.mxu0 0
        %453 = vmatpush1.bf16.xpose.msra.mxu0 0
        %454 = vmatprep.subr.bf16.mxu0 0
        %455 = vmatpush1.bf16.xpose.msra.mxu0 0
        %456 = vmatprep.subr.bf16.mxu0 0
        %457 = vmatpush1.bf16.xpose.msra.mxu0 %v441
        %458 = vmatprep.subr.bf16.mxu0 0
        %459 = vmatpush2.bf16.xpose.msra.mxu0 0
        %460 = vmatprep.subr.bf16.mxu0 0
        %461 = vmatpush2.bf16.xpose.msra.mxu0 0
        %462 = vmatprep.subr.bf16.mxu0 0
        %463 = vmatpush2.bf16.xpose.msra.mxu0 0
        %464 = vmatprep.subr.bf16.mxu0 0
        %465 = vmatpush2.bf16.xpose.msra.mxu0 0
        %466 = vmatprep.subr.bf16.mxu0 0
        %467 = vmatpush2.bf16.xpose.msra.mxu0 0
        %468 = vmatprep.subr.bf16.mxu0 0
        %469 = vmatpush2.bf16.xpose.msra.mxu0 0
        %470 = vmatprep.subr.bf16.mxu0 0
        %471 = vmatpush2.bf16.xpose.msra.mxu0 0
        %472 = vmatprep.subr.bf16.mxu0 0
        %473 = vmatpush2.bf16.xpose.msra.mxu0 0
        %474 = vmatprep.mubr.bf16.mxu0 0
        %475 = vmatmul.mubr.bf16.gmra.mxu0 %v440
        %v476 = vpop.f32.mrf.mxu0
        %v477 = vadd.f32 0.0, %v476
        %v478 = vpop.f32.mrf.mxu0
        %v479 = vpop.f32.mrf.mxu0
        %v480 = vpop.f32.mrf.mxu0
        %481 = vdwg.mxu0
        %vm482 = vcmask 64512
        %v483 = vsel %vm482, %v477, -inf
        %484 = vmax.xlane.f32.xlu0 %v483
        %v485 = vpop.xlane.xlu0 %484
        %v486 = vsub.f32 %v477, %v485
        %v487 = vmul.f32 %v486, 1.442695
        %v488 = vpow.pop %v487
        %v489 = vsel %vm482, %v488, 0.0
        %490 = vadd.xlane.f32.xlu0 %v489
        %v491 = vpop.xlane.xlu0 %490
        %v492 = vrcp.pop %v491
        %v493 = vmul.f32 %v488, %v492
        %v495 = vsel %vm482, %v493, 0
        %497 = vmatprep.subr.mxu0 0.0
        %498 = vmatpush1.msra.mxu0 0.0
        %499 = vmatprep.subr.mxu0 0.0
        %500 = vmatpush1.msra.mxu0 0.0
        %501 = vmatprep.subr.mxu0 0.0
        %502 = vmatpush1.msra.mxu0 0.0
        %503 = vmatprep.subr.mxu0 0.0
        %504 = vmatpush1.msra.mxu0 0.0
        %505 = vmatprep.subr.mxu0 0.0
        %506 = vmatpush1.msra.mxu0 0.0
        %507 = vmatprep.subr.mxu0 0.0
        %508 = vmatpush1.msra.mxu0 0.0
        %509 = vmatprep.subr.mxu0 0.0
        %510 = vmatpush1.msra.mxu0 0.0
        %511 = vmatprep.subr.mxu0 0.0
        %512 = vmatpush1.msra.mxu0 0.0
        %513 = vmatprep.subr.mxu0 0.0
        %514 = vmatpush1.msra.mxu0 0.0
        %515 = vmatprep.subr.mxu0 0.0
        %516 = vmatpush1.msra.mxu0 0.0
        %517 = vmatprep.subr.mxu0 0.0
        %518 = vmatpush1.msra.mxu0 0.0
        %519 = vmatprep.subr.mxu0 0.0
        %520 = vmatpush1.msra.mxu0 0.0
        %521 = vmatprep.subr.mxu0 0.0
        %522 = vmatpush1.msra.mxu0 0.0
        %523 = vmatprep.subr.mxu0 0.0
        %524 = vmatpush1.msra.mxu0 0.0
        %525 = vmatprep.subr.mxu0 0.0
        %526 = vmatpush1.msra.mxu0 0.0
        %527 = vmatprep.subr.mxu0 0.0
        %528 = vmatpush1.msra.mxu0 %v434
        %529 = vmatprep.subr.mxu0 0.0
        %530 = vmatpush2.msra.mxu0 0.0
        %531 = vmatprep.subr.mxu0 0.0
        %532 = vmatpush2.msra.mxu0 0.0
        %533 = vmatprep.subr.mxu0 0.0
        %534 = vmatpush2.msra.mxu0 0.0
        %535 = vmatprep.subr.mxu0 0.0
        %536 = vmatpush2.msra.mxu0 0.0
        %537 = vmatprep.subr.mxu0 0.0
        %538 = vmatpush2.msra.mxu0 0.0
        %539 = vmatprep.subr.mxu0 0.0
        %540 = vmatpush2.msra.mxu0 0.0
        %541 = vmatprep.subr.mxu0 0.0
        %542 = vmatpush2.msra.mxu0 0.0
        %543 = vmatprep.subr.mxu0 0.0
        %544 = vmatpush2.msra.mxu0 0.0
        %545 = vmatprep.subr.mxu0 0.0
        %546 = vmatpush2.msra.mxu0 0.0
        %547 = vmatprep.subr.mxu0 0.0
        %548 = vmatpush2.msra.mxu0 0.0
        %549 = vmatprep.subr.mxu0 0.0
        %550 = vmatpush2.msra.mxu0 0.0
        %551 = vmatprep.subr.mxu0 0.0
        %552 = vmatpush2.msra.mxu0 0.0
        %553 = vmatprep.subr.mxu0 0.0
        %554 = vmatpush2.msra.mxu0 0.0
        %555 = vmatprep.subr.mxu0 0.0
        %556 = vmatpush2.msra.mxu0 0.0
        %557 = vmatprep.subr.mxu0 0.0
        %558 = vmatpush2.msra.mxu0 0.0
        %559 = vmatprep.subr.mxu0 0.0
        %560 = vmatpush2.msra.mxu0 0.0
        %561 = vmatprep.mubr.f32.mxu0 0.0
        %562 = vmatmul.mubr.f32.gmra.mxu0 %v495
        %v563 = vpop.f32.mrf.mxu0
        %v564 = vadd.f32 0.0, %v563
        %v565 = vpop.f32.mrf.mxu0
        %566 = vdwg.mxu0
        %v567 = vpack.c.bf16 %v564, %v564
        %v568 = vld [vmem:[#allocation5] sm:$0xf]
        %v569 = vld [vmem:[#allocation5 + $0x4] sm:$0xf]
        %v570 = vld [vmem:[#allocation5 + $0x8] sm:$0xf]
        %v571 = vld [vmem:[#allocation5 + $0xc] sm:$0xf]
        %v572 = vld [vmem:[#allocation5 + $0x10] sm:$0xf]
        %v573 = vld [vmem:[#allocation5 + $0x14] sm:$0xf]
        %v574 = vld [vmem:[#allocation5 + $0x18] sm:$0xf]
        %v575 = vld [vmem:[#allocation5 + $0x1c] sm:$0xf]
        %v576 = vld [vmem:[#allocation5 + $0x20] sm:$0xf]
        %v577 = vld [vmem:[#allocation5 + $0x24] sm:$0xf]
        %v578 = vld [vmem:[#allocation5 + $0x28] sm:$0xf]
        %v579 = vld [vmem:[#allocation5 + $0x2c] sm:$0xf]
        %v580 = vld [vmem:[#allocation5 + $0x30] sm:$0xf]
        %v581 = vld [vmem:[#allocation5 + $0x34] sm:$0xf]
        %v582 = vld [vmem:[#allocation5 + $0x38] sm:$0xf]
        %v583 = vld [vmem:[#allocation5 + $0x3c] sm:$0xf]
        %v600 = vunpack.c.l.b16 %v568
        %v601 = vunpack.c.l.b16 %v569
        %v602 = vunpack.c.l.b16 %v570
        %v603 = vunpack.c.l.b16 %v571
        %v604 = vunpack.c.l.b16 %v572
        %v605 = vunpack.c.l.b16 %v573
        %v606 = vunpack.c.l.b16 %v574
        %v607 = vunpack.c.l.b16 %v575
        %v608 = vunpack.c.l.b16 %v576
        %v609 = vunpack.c.l.b16 %v577
        %v610 = vunpack.c.l.b16 %v578
        %v611 = vunpack.c.l.b16 %v579
        %v612 = vunpack.c.l.b16 %v580
        %v613 = vunpack.c.l.b16 %v581
        %v614 = vunpack.c.l.b16 %v582
        %v615 = vunpack.c.l.b16 %v583
        %v616 = vpack.c.b16 %v601, %v600
        %v617 = vpack.c.b16 %v603, %v602
        %v618 = vpack.c.b16 %v605, %v604
        %v619 = vpack.c.b16 %v607, %v606
        %v620 = vpack.c.b16 %v609, %v608
        %v621 = vpack.c.b16 %v611, %v610
        %v622 = vpack.c.b16 %v613, %v612
        %v623 = vpack.c.b16 %v615, %v614
        %632 = vmatprep.subr.bf16.mxu0 0
        %633 = vmatpush1.bf16.msra.mxu0 %v623
        %634 = vmatprep.subr.bf16.mxu0 0
        %635 = vmatpush1.bf16.msra.mxu0 %v622
        %636 = vmatprep.subr.bf16.mxu0 0
        %637 = vmatpush1.bf16.msra.mxu0 %v621
        %638 = vmatprep.subr.bf16.mxu0 0
        %639 = vmatpush1.bf16.msra.mxu0 %v620
        %640 = vmatprep.subr.bf16.mxu0 0
        %641 = vmatpush1.bf16.msra.mxu0 %v619
        %642 = vmatprep.subr.bf16.mxu0 0
        %643 = vmatpush1.bf16.msra.mxu0 %v618
        %644 = vmatprep.subr.bf16.mxu0 0
        %645 = vmatpush1.bf16.msra.mxu0 %v617
        %646 = vmatprep.subr.bf16.mxu0 0
        %647 = vmatpush1.bf16.msra.mxu0 %v616
        %648 = vmatprep.subr.bf16.mxu0 0
        %649 = vmatpush2.bf16.msra.mxu0 0
        %650 = vmatprep.subr.bf16.mxu0 0
        %651 = vmatpush2.bf16.msra.mxu0 0
        %652 = vmatprep.subr.bf16.mxu0 0
        %653 = vmatpush2.bf16.msra.mxu0 0
        %654 = vmatprep.subr.bf16.mxu0 0
        %655 = vmatpush2.bf16.msra.mxu0 0
        %656 = vmatprep.subr.bf16.mxu0 0
        %657 = vmatpush2.bf16.msra.mxu0 0
        %658 = vmatprep.subr.bf16.mxu0 0
        %659 = vmatpush2.bf16.msra.mxu0 0
        %660 = vmatprep.subr.bf16.mxu0 0
        %661 = vmatpush2.bf16.msra.mxu0 0
        %662 = vmatprep.subr.bf16.mxu0 0
        %663 = vmatpush2.bf16.msra.mxu0 0
        %664 = vmatprep.mubr.bf16.mxu0 0
        %665 = vmatmul.mubr.bf16.gmra.mxu0 %v567
        %v666 = vpop.f32.mrf.mxu0
        %v667 = vadd.f32 0.0, %v666
        %v668 = vpop.f32.mrf.mxu0
        %v669 = vpop.f32.mrf.mxu0
        %v670 = vpop.f32.mrf.mxu0
        %671 = vdwg.mxu0
        %672 = vst [vmem:[%s191] sm:$0xff] %v667
        %s673 = sand.u32 %s95, 1
        %s674 = scalar_lea.sflag [#allocation4], %s673
        %s675 = sand.u32 %s95, 1
        %s676 = smul.addr %s675, 8
        %s677 = scalar_lea.vmem [#allocation7], %s676
        // Predicated region
        $region41: #{attention_forward.1} parent=31 // pred_check
          %p678 = pneg %p105
        $region42: #{attention_forward.1} parent=31 // pred_check_branch
          %680 = sbr.rel (%p678) target = $region44
        $region43: #{attention_forward.1} parent=31 // pred_region
          %s682 = ssub.s32 128, 128
          %683 = vsyncadd %s674, %s682
          %s684 = smul.addr %s19, 128
          %s685 = scalar_lea.hbm %s3, %s684
          %s687 = sshll.u32 %s677, 4
          %s688 = int_to_ptr.vmem [resolvable:$true] %s687
          %690 = dma.vmem_to_hbm [thread:$0]  %s688, 128, %s685, %s674
        $region44: #{attention_forward.1} parent=31 // pred_fallthru
          _
      $region32: #{attention_forward.1} parent=5 // pred_fallthru
        _
      %p691 = scmp.le.s32.totalorder 2, %s14
      // Predicated region
      $region45: #{attention_forward.1} parent=5 // pred_check
        %p692 = pneg %p691
      $region46: #{attention_forward.1} parent=5 // pred_check_branch
        %694 = sbr.rel (%p692) target = $region48
      $region47: #{attention_forward.1} parent=5 // pred_region
        %s695 = ssub.s32 %s14, 2
        // Predicated region
        $region49: #{attention_forward.1} parent=47 // pred_check
          %p696 = pneg %p111
        $region50: #{attention_forward.1} parent=47 // pred_check_branch
          %698 = sbr.rel (%p696) target = $region52
        $region51: #{attention_forward.1} parent=47 // pred_region
          %s699 = sand.u32 %s96, 1
          %s700 = scalar_lea.sflag [#allocation4], %s699
          %s701 = sand.u32 %s96, 1
          %s702 = smul.addr %s701, 8
          %s703 = scalar_lea.vmem [#allocation7], %s702
          %704 = dma.done %s700, 128
        $region52: #{attention_forward.1} parent=47 // pred_fallthru
          _
      $region48: #{attention_forward.1} parent=5 // pred_fallthru
        _
    $region6: #{attention_forward.1} parent=1 // loop_footer
      %s18 = sadd.s32 1, %s14
    $region7: #{attention_forward.1} parent=1 // loop_footer_branch
      %13 = sbr.rel target = $region3
    $region8: #{attention_forward.1} parent=1 // loop_exit
      _
    %705 = vsyncpa [#allocation3], 1
    %s706 = scalar_lea.sflag [#allocation3], 1
    %707 = vsyncpa %s706, 1
    %708 = vsyncpa [#allocation6], 1
    %709 = vsyncpa [#allocation4], 1
    %s710 = scalar_lea.sflag [#allocation4], 1
    %711 = vsyncpa %s710, 1

</llo_original>
